<compile_context>
chip_gen: v7x
topology: tpu7x:2x2x1
jax: 0.10.0
libtpu: 0.0.40
codegen_flags: <defaults>
</compile_context>

<pallas_src>
import functools

import jax
import jax.numpy as jnp
import numpy as np
from jax.experimental import pallas as pl
from jax.experimental.pallas import tpu as pltpu

GRAFT_RATIO = 1e-4
SIGMOID_BIAS = -5.0


def _round_up(n, m):
    return ((n + m - 1) // m) * m


# --------------------------------------------------------------------------
# Kernel 1: once-per-forward graft of both layer packs
# --------------------------------------------------------------------------
def _graft_pack_kernel(l1_ref, l2_ref, w1_ref, b1_ref, w2_ref, b2_ref, *,
                       din_p, h_p):
    """grafted = A + sigmoid(P + bias) * C for both packs; emit bf16 W, f32 b."""

    def graft(pack_ref, in_p, w_ref, b_ref):
        # pack_ref: (3, in_p + 8, out_p) = [A, C, P] stacked, f32.
        s = jax.nn.sigmoid(pack_ref[2] + SIGMOID_BIAS)      # EUP
        g = pack_ref[0] + s * pack_ref[1]                    # 1 FMA / elem, f32
        w_ref[...] = g[:in_p, :].astype(jnp.bfloat16)        # (in_p, out_p) bf16
        b_ref[...] = g[in_p:in_p + 1, :]                     # (1, out_p)    f32

    graft(l1_ref, din_p, w1_ref, b1_ref)
    graft(l2_ref, h_p, w2_ref, b2_ref)


# --------------------------------------------------------------------------
# Kernel 2: hot batch-tiled MLP on pre-grafted weights
# --------------------------------------------------------------------------
def _grafted_mlp_kernel(x_ref, w1_ref, b1_ref, w2_ref, b2_ref, o_ref):
    """One batch tile: x @ W1 + b1 -> relu -> @ W2 + b2. f32 accumulate."""
    h = jnp.dot(x_ref[...], w1_ref[...], preferred_element_type=jnp.float32)
    h = jnp.maximum(h + b1_ref[...], 0.0)
    y = jnp.dot(h.astype(jnp.bfloat16), w2_ref[...],
                preferred_element_type=jnp.float32) + b2_ref[...]
    o_ref[...] = y.astype(o_ref.dtype)                       # lane-dense store


# --------------------------------------------------------------------------
# Init-time precompute (mirrors GraftedModel.__init__)
# --------------------------------------------------------------------------
def precompute_grafting(base_sd, fine_sd, trainable, graft_ratio=GRAFT_RATIO,
                        din_p=128, h_p=128, dout_p=128):
    """Diffs, quantile threshold, masks, then fold + transpose + pad + pack.

    Returns (l1_pack, l2_pack, base_masks).  Packs have shape
    (3, in_p + 8, out_p): [A; C; P] stacked, weights transposed to (in, out),
    bias in row in_p, zero padding elsewhere.
    """
    diffs = {n: fine_sd[n] - base_sd[n] for n in base_sd}
    all_diffs = jnp.concatenate([jnp.abs(d).ravel() for d in diffs.values()])
    # TODO(synk): quantile/sort has no clean Pallas equivalent; kept in plain JAX.
    threshold = jnp.quantile(all_diffs, 1.0 - graft_ratio)
    masks = {n: (jnp.abs(d) >= threshold).astype(jnp.float32)
             for n, d in diffs.items()}

    # Algebraic fold: grafted = A + sigmoid(P + bias) * C
    A = {n: base_sd[n] + masks[n] * diffs[n] for n in base_sd}
    C = {n: diffs[n] * (1.0 - 2.0 * masks[n]) for n in base_sd}
    P = trainable

    def pack_layer(wn, bn, in_p, out_p):
        def slab(d):
            wt = d[wn].T                                       # (in, out)
            wt = jnp.pad(wt, ((0, in_p - wt.shape[0]),
                              (0, out_p - wt.shape[1])))
            b = jnp.pad(d[bn], (0, out_p - d[bn].shape[0])).reshape(1, out_p)
            b = jnp.pad(b, ((0, 7), (0, 0)))                   # 8-row bias tile
            return jnp.concatenate([wt, b], axis=0)            # (in_p+8, out_p)
        return jnp.stack([slab(A), slab(C), slab(P)], axis=0)  # (3, in_p+8, out_p)

    l1_pack = pack_layer("w1", "b1", din_p, h_p)
    l2_pack = pack_layer("w2", "b2", h_p, dout_p)
    return l1_pack, l2_pack, masks


# --------------------------------------------------------------------------
# Pallas wrappers (hot path)
# --------------------------------------------------------------------------
def graft_params(l1_pack, l2_pack):
    """Once-per-forward graft: (3,R,C) packs -> bf16 W1,W2 + f32 b1,b2."""
    _, r1, h_p = l1_pack.shape
    din_p = r1 - 8
    _, r2, dout_p = l2_pack.shape
    assert r2 - 8 == h_p, "layer packs are inconsistent"

    kernel = functools.partial(_graft_pack_kernel, din_p=din_p, h_p=h_p)
    return pl.pallas_call(
        kernel,
        out_shape=(
            jax.ShapeDtypeStruct((din_p, h_p), jnp.bfloat16),
            jax.ShapeDtypeStruct((1, h_p), jnp.float32),
            jax.ShapeDtypeStruct((h_p, dout_p), jnp.bfloat16),
            jax.ShapeDtypeStruct((1, dout_p), jnp.float32),
        ),
        grid=(1,),
        in_specs=[
            pl.BlockSpec(l1_pack.shape, lambda i: (0, 0, 0)),
            pl.BlockSpec(l2_pack.shape, lambda i: (0, 0, 0)),
        ],
        out_specs=(
            pl.BlockSpec((din_p, h_p), lambda i: (0, 0)),
            pl.BlockSpec((1, h_p), lambda i: (0, 0)),
            pl.BlockSpec((h_p, dout_p), lambda i: (0, 0)),
            pl.BlockSpec((1, dout_p), lambda i: (0, 0)),
        ),
    )(l1_pack, l2_pack)


def grafted_forward(x, l1_pack, l2_pack, *, batch_tile=256):
    """Graft (once) + batch-tiled MLP. Returns (B, dout_p) bf16 lane-dense slab."""
    B, din = x.shape
    _, r1, h_p = l1_pack.shape
    din_p = r1 - 8
    _, r2, dout_p = l2_pack.shape
    assert r2 - 8 == h_p, "layer packs are inconsistent"

    # ---- once per forward: graft both layers (O(params), not O(params*steps))
    w1, b1, w2, b2 = graft_params(l1_pack, l2_pack)

    # ---- batch tiling: big tiles, >=2 grid steps when the batch allows it
    # (v7x has 2 TensorCores; a single-step grid leaves one idle).  Tiles are
    # multiples of 16 so bf16 x / bf16 output blocks stay layout-native.
    batch_tile = max(16, _round_up(batch_tile, 16))
    b16 = _round_up(B, 16)
    if b16 <= batch_tile:
        tb = max(16, _round_up(pl.cdiv(b16, 2), 16))
    else:
        tb = batch_tile
    B_p = _round_up(B, tb)

    # Pad + cast x in the wrapper: bf16 halves streamed HBM->VMEM bytes and
    # removes a per-step VALU pack.
    x_p = jnp.pad(x, ((0, B_p - B), (0, din_p - din))).astype(jnp.bfloat16)

    y_p = pl.pallas_call(
        _grafted_mlp_kernel,
        out_shape=jax.ShapeDtypeStruct((B_p, dout_p), jnp.bfloat16),
        grid=(B_p // tb,),
        in_specs=[
            # batch tile marches with the grid
            pl.BlockSpec((tb, din_p), lambda i: (i, 0)),
            # grafted weights/biases: constant block index -> fetched once,
            # stay resident in VMEM across all grid steps.
            pl.BlockSpec((din_p, h_p), lambda i: (0, 0)),
            pl.BlockSpec((1, h_p), lambda i: (0, 0)),
            pl.BlockSpec((h_p, dout_p), lambda i: (0, 0)),
            pl.BlockSpec((1, dout_p), lambda i: (0, 0)),
        ],
        out_specs=pl.BlockSpec((tb, dout_p), lambda i: (i, 0)),
        compiler_params=pltpu.CompilerParams(
            dimension_semantics=("parallel",)),   # megacore / v7x dual-TC
    )(x_p, w1, b1, w2, b2)
    return y_p[:B]


# --------------------------------------------------------------------------
# Pure-JAX reference mirroring the PyTorch forward (soft-mask path, unfolded)
# --------------------------------------------------------------------------
def reference_forward(x, base_sd, fine_sd, base_masks, trainable):
    g = {}
    for n in base_sd:
        m = base_masks[n].astype(jnp.float32)
        s = jax.nn.sigmoid(trainable[n] + SIGMOID_BIAS)
        soft = (1.0 - m) * s + m * (1.0 - s)
        g[n] = fine_sd[n] * soft + base_sd[n] * (1.0 - soft)
    h = x @ g["w1"].T + g["b1"]
    h = jnp.maximum(h, 0.0)
    return h @ g["w2"].T + g["b2"]


if __name__ == "__main__":
    # Small logical shapes: batch=32, in=64, hidden=32, out=16
    B, DIN, H, DOUT = 32, 64, 32, 16

    key = jax.random.PRNGKey(0)
    keys = jax.random.split(key, 16)

    base_sd = {
        "w1": jax.random.normal(keys[0], (H, DIN), jnp.float32) * 0.1,
        "b1": jax.random.normal(keys[1], (H,), jnp.float32) * 0.1,
        "w2": jax.random.normal(keys[2], (DOUT, H), jnp.float32) * 0.1,
        "b2": jax.random.normal(keys[3], (DOUT,), jnp.float32) * 0.1,
    }
    fine_sd = {
        "w1": base_sd["w1"] + jax.random.normal(keys[4], (H, DIN), jnp.float32) * 0.05,
        "b1": base_sd["b1"] + jax.random.normal(keys[5], (H,), jnp.float32) * 0.05,
        "w2": base_sd["w2"] + jax.random.normal(keys[6], (DOUT, H), jnp.float32) * 0.05,
        "b2": base_sd["b2"] + jax.random.normal(keys[7], (DOUT,), jnp.float32) * 0.05,
    }
    trainable = {
        "w1": jax.random.normal(keys[8], (H, DIN), jnp.float32),
        "b1": jax.random.normal(keys[9], (H,), jnp.float32),
        "w2": jax.random.normal(keys[10], (DOUT, H), jnp.float32),
        "b2": jax.random.normal(keys[11], (DOUT,), jnp.float32),
    }

    # __init__-time precompute: quantile threshold, masks, folded+packed params.
    l1_pack, l2_pack, base_masks = precompute_grafting(base_sd, fine_sd, trainable)

    x = jax.random.normal(keys[12], (B, DIN), jnp.float32)

    y_pad = grafted_forward(x, l1_pack, l2_pack)   # (B, 128) bf16 lane-dense slab
    y_pad = jax.block_until_ready(y_pad)
    y = np.asarray(y_pad[:, :DOUT].astype(jnp.float32))   # trim feature padding

    y_ref = np.asarray(reference_forward(x, base_sd, fine_sd, base_masks, trainable))
    # Tolerance accounts for bf16 MXU inputs/output (f32 accumulation).
    np.testing.assert_allclose(y, y_ref, rtol=2e-2, atol=2e-2)

    print("KERNEL_OK")
</pallas_src>

<mosaic_0001>
module attributes {stable_mosaic.version = 11 : i64} {
  func.func @_graft_pack_kernel(%arg0: i32, %arg1: memref<3x136x128xf32, #tpu.memory_space<vmem>>, %arg2: memref<3x136x128xf32, #tpu.memory_space<vmem>>, %arg3: memref<128x128xbf16, #tpu.memory_space<vmem>>, %arg4: memref<1x128xf32, #tpu.memory_space<vmem>>, %arg5: memref<128x128xbf16, #tpu.memory_space<vmem>>, %arg6: memref<1x128xf32, #tpu.memory_space<vmem>>) attributes {dimension_semantics = [#tpu.dimension_semantics<arbitrary>], iteration_bounds = array<i64: 1>, scalar_prefetch = 0 : i64, scratch_operands = 0 : i64, tpu.core_type = #tpu.core_type<tc>, window_params = [{pipeline_mode = #tpu.pipeline_mode<synchronous>, transform_indices = @transform_0, window_bounds = array<i64: 3, 136, 128>}, {pipeline_mode = #tpu.pipeline_mode<synchronous>, transform_indices = @transform_1, window_bounds = array<i64: 3, 136, 128>}, {pipeline_mode = #tpu.pipeline_mode<synchronous>, transform_indices = @transform_2, window_bounds = array<i64: 128, 128>}, {pipeline_mode = #tpu.pipeline_mode<synchronous>, transform_indices = @transform_3, window_bounds = array<i64: 1, 128>}, {pipeline_mode = #tpu.pipeline_mode<synchronous>, transform_indices = @transform_4, window_bounds = array<i64: 128, 128>}, {pipeline_mode = #tpu.pipeline_mode<synchronous>, transform_indices = @transform_5, window_bounds = array<i64: 1, 128>}]} {
    %c2 = arith.constant 2 : index
    %c0 = arith.constant 0 : index
    %c0_0 = arith.constant 0 : index
    %0 = vector.load %arg1[%c2, %c0, %c0_0] : memref<3x136x128xf32, #tpu.memory_space<vmem>>, vector<1x136x128xf32>
    %1 = vector.shape_cast %0 : vector<1x136x128xf32> to vector<136x128xf32>
    %cst = arith.constant -5.000000e+00 : f32
    %2 = vector.broadcast %cst : f32 to vector<136x128xf32>
    %3 = arith.addf %1, %2 : vector<136x128xf32>
    %4 = arith.negf %3 : vector<136x128xf32>
    %5 = math.exp %4 : vector<136x128xf32>
    %cst_1 = arith.constant 1.000000e+00 : f32
    %6 = vector.broadcast %cst_1 : f32 to vector<136x128xf32>
    %7 = arith.addf %6, %5 : vector<136x128xf32>
    %8 = arith.divf %6, %7 : vector<136x128xf32>
    %c0_2 = arith.constant 0 : index
    %c0_3 = arith.constant 0 : index
    %c0_4 = arith.constant 0 : index
    %9 = vector.load %arg1[%c0_2, %c0_3, %c0_4] : memref<3x136x128xf32, #tpu.memory_space<vmem>>, vector<1x136x128xf32>
    %10 = vector.shape_cast %9 : vector<1x136x128xf32> to vector<136x128xf32>
    %c1 = arith.constant 1 : index
    %c0_5 = arith.constant 0 : index
    %c0_6 = arith.constant 0 : index
    %11 = vector.load %arg1[%c1, %c0_5, %c0_6] : memref<3x136x128xf32, #tpu.memory_space<vmem>>, vector<1x136x128xf32>
    %12 = vector.shape_cast %11 : vector<1x136x128xf32> to vector<136x128xf32>
    %13 = arith.mulf %8, %12 : vector<136x128xf32>
    %14 = arith.addf %10, %13 : vector<136x128xf32>
    %15 = vector.extract_strided_slice %14 {offsets = [0, 0], sizes = [128, 128], strides = [1, 1]} : vector<136x128xf32> to vector<128x128xf32>
    %16 = arith.truncf %15 : vector<128x128xf32> to vector<128x128xbf16>
    %c0_7 = arith.constant 0 : index
    %c0_8 = arith.constant 0 : index
    %17 = vector.load %arg3[%c0_7, %c0_8] : memref<128x128xbf16, #tpu.memory_space<vmem>>, vector<128x128xbf16>
    tpu.vector_store %arg3[%c0_7, %c0_8], %16 {strides = array<i32>} : memref<128x128xbf16, #tpu.memory_space<vmem>>, vector<128x128xbf16>,
    %18 = vector.extract_strided_slice %14 {offsets = [128, 0], sizes = [1, 128], strides = [1, 1]} : vector<136x128xf32> to vector<1x128xf32>
    %c0_9 = arith.constant 0 : index
    %c0_10 = arith.constant 0 : index
    %19 = vector.load %arg4[%c0_9, %c0_10] : memref<1x128xf32, #tpu.memory_space<vmem>>, vector<1x128xf32>
    tpu.vector_store %arg4[%c0_9, %c0_10], %18 {strides = array<i32>} : memref<1x128xf32, #tpu.memory_space<vmem>>, vector<1x128xf32>,
    %c2_11 = arith.constant 2 : index
    %c0_12 = arith.constant 0 : index
    %c0_13 = arith.constant 0 : index
    %20 = vector.load %arg2[%c2_11, %c0_12, %c0_13] : memref<3x136x128xf32, #tpu.memory_space<vmem>>, vector<1x136x128xf32>
    %21 = vector.shape_cast %20 : vector<1x136x128xf32> to vector<136x128xf32>
    %cst_14 = arith.constant -5.000000e+00 : f32
    %22 = vector.broadcast %cst_14 : f32 to vector<136x128xf32>
    %23 = arith.addf %21, %22 : vector<136x128xf32>
    %24 = arith.negf %23 : vector<136x128xf32>
    %25 = math.exp %24 : vector<136x128xf32>
    %cst_15 = arith.constant 1.000000e+00 : f32
    %26 = vector.broadcast %cst_15 : f32 to vector<136x128xf32>
    %27 = arith.addf %26, %25 : vector<136x128xf32>
    %28 = arith.divf %26, %27 : vector<136x128xf32>
    %c0_16 = arith.constant 0 : index
    %c0_17 = arith.constant 0 : index
    %c0_18 = arith.constant 0 : index
    %29 = vector.load %arg2[%c0_16, %c0_17, %c0_18] : memref<3x136x128xf32, #tpu.memory_space<vmem>>, vector<1x136x128xf32>
    %30 = vector.shape_cast %29 : vector<1x136x128xf32> to vector<136x128xf32>
    %c1_19 = arith.constant 1 : index
    %c0_20 = arith.constant 0 : index
    %c0_21 = arith.constant 0 : index
    %31 = vector.load %arg2[%c1_19, %c0_20, %c0_21] : memref<3x136x128xf32, #tpu.memory_space<vmem>>, vector<1x136x128xf32>
    %32 = vector.shape_cast %31 : vector<1x136x128xf32> to vector<136x128xf32>
    %33 = arith.mulf %28, %32 : vector<136x128xf32>
    %34 = arith.addf %30, %33 : vector<136x128xf32>
    %35 = vector.extract_strided_slice %34 {offsets = [0, 0], sizes = [128, 128], strides = [1, 1]} : vector<136x128xf32> to vector<128x128xf32>
    %36 = arith.truncf %35 : vector<128x128xf32> to vector<128x128xbf16>
    %c0_22 = arith.constant 0 : index
    %c0_23 = arith.constant 0 : index
    %37 = vector.load %arg5[%c0_22, %c0_23] : memref<128x128xbf16, #tpu.memory_space<vmem>>, vector<128x128xbf16>
    tpu.vector_store %arg5[%c0_22, %c0_23], %36 {strides = array<i32>} : memref<128x128xbf16, #tpu.memory_space<vmem>>, vector<128x128xbf16>,
    %38 = vector.extract_strided_slice %34 {offsets = [128, 0], sizes = [1, 128], strides = [1, 1]} : vector<136x128xf32> to vector<1x128xf32>
    %c0_24 = arith.constant 0 : index
    %c0_25 = arith.constant 0 : index
    %39 = vector.load %arg6[%c0_24, %c0_25] : memref<1x128xf32, #tpu.memory_space<vmem>>, vector<1x128xf32>
    tpu.vector_store %arg6[%c0_24, %c0_25], %38 {strides = array<i32>} : memref<1x128xf32, #tpu.memory_space<vmem>>, vector<1x128xf32>,
    return
  }
  func.func @transform_0(%arg0: i32) -> (i32, i32, i32) {
    %c0_i32 = arith.constant 0 : i32
    %c0_i32_0 = arith.constant 0 : i32
    %c0_i32_1 = arith.constant 0 : i32
    %c0_i32_2 = arith.constant 0 : i32
    return %c0_i32, %c0_i32_0, %c0_i32_1 : i32, i32, i32
  }
  func.func @transform_1(%arg0: i32) -> (i32, i32, i32) {
    %c0_i32 = arith.constant 0 : i32
    %c0_i32_0 = arith.constant 0 : i32
    %c0_i32_1 = arith.constant 0 : i32
    %c0_i32_2 = arith.constant 0 : i32
    return %c0_i32, %c0_i32_0, %c0_i32_1 : i32, i32, i32
  }
  func.func @transform_2(%arg0: i32) -> (i32, i32) {
    %c0_i32 = arith.constant 0 : i32
    %c0_i32_0 = arith.constant 0 : i32
    %c0_i32_1 = arith.constant 0 : i32
    return %c0_i32, %c0_i32_0 : i32, i32
  }
  func.func @transform_3(%arg0: i32) -> (i32, i32) {
    %c0_i32 = arith.constant 0 : i32
    %c0_i32_0 = arith.constant 0 : i32
    %c0_i32_1 = arith.constant 0 : i32
    return %c0_i32, %c0_i32_0 : i32, i32
  }
  func.func @transform_4(%arg0: i32) -> (i32, i32) {
    %c0_i32 = arith.constant 0 : i32
    %c0_i32_0 = arith.constant 0 : i32
    %c0_i32_1 = arith.constant 0 : i32
    return %c0_i32, %c0_i32_0 : i32, i32
  }
  func.func @transform_5(%arg0: i32) -> (i32, i32) {
    %c0_i32 = arith.constant 0 : i32
    %c0_i32_0 = arith.constant 0 : i32
    %c0_i32_1 = arith.constant 0 : i32
    return %c0_i32, %c0_i32_0 : i32, i32
  }
}

</mosaic_0001>

<llo_original>
// kernel: tpu_custom_call.1
$region0: #{tpu_custom_call.1}
  #allocation0 [shape = 'u32[]', space=smem, size = 0x4, offset = 0x4, fixed_abs, tag = 'smem constant byte address 0x4 - core index']
  #allocation1 [shape = 'u32[144,128]{1,0:T(1,128)}', space=vmem, size = 0x12000, scoped, tag = 'internal scratch']
  %s0 = inlined_call_operand.hbm [shape: f32[3,136,128], index: 0, kind: input, shape index: {}]
  %s1 = inlined_call_operand.hbm [shape: f32[3,136,128], index: 1, kind: input, shape index: {}]
  %s2 = inlined_call_operand.hbm [shape: bf16[128,128], index: 2, kind: output, shape index: {0}]
  %s3 = inlined_call_operand.hbm [shape: f32[1,128], index: 3, kind: output, shape index: {1}]
  %s4 = inlined_call_operand.hbm [shape: bf16[128,128], index: 4, kind: output, shape index: {2}]
  %s5 = inlined_call_operand.hbm [shape: f32[1,128], index: 5, kind: output, shape index: {3}]
  %6 = xla_tuple %s2, %s3, %s4, %s5
  %s7 = sld [smem:[#allocation0]]
  $region50: #{tpu_custom_call.1} parent=0
    _
  %s9 = ssub.s32 1, %s7
  %s10 = scalar_select 0, %s9, %s7
  $region1: #{tpu_custom_call.1} parent=0
    #allocation2 [shape = 'u8[208896]{0}', space=vmem, size = 0x33000, scoped, tag = 'input window, operand 0, single buffered']
    #allocation3 [shape = 's32[1]{0}', space=sflag, size = 0x4, scoped, tag = 'scoped memory for tpu_custom_call.1']
    #allocation4 [shape = 's32[1]{0}', space=sflag, size = 0x4, scoped, tag = 'scoped memory for tpu_custom_call.1']
    #allocation5 [shape = 'u8[208896]{0}', space=vmem, size = 0x33000, scoped, tag = 'input window, operand 1, single buffered']
    #allocation6 [shape = 's32[1]{0}', space=sflag, size = 0x4, scoped, tag = 'scoped memory for tpu_custom_call.1']
    #allocation7 [shape = 'u8[32768]{0}', space=vmem, size = 0x8000, scoped, tag = 'output window, operand 0, single buffered']
    #allocation8 [shape = 'u8[512]{0}', space=vmem, size = 0x400, scoped, tag = 'output window, operand 1, single buffered']
    #allocation9 [shape = 's32[1]{0}', space=sflag, size = 0x4, scoped, tag = 'scoped memory for tpu_custom_call.1']
    #allocation10 [shape = 'u8[32768]{0}', space=vmem, size = 0x8000, scoped, tag = 'output window, operand 2, single buffered']
    #allocation11 [shape = 'u8[512]{0}', space=vmem, size = 0x400, scoped, tag = 'output window, operand 3, single buffered']
    #allocation12 [shape = 's32[1]{0}', space=sflag, size = 0x4, scoped, tag = 'scoped memory for tpu_custom_call.1']
    %11 = vsyncpa [#allocation3], 0
    %12 = vsyncpa [#allocation6], 0
    %13 = vsyncpa [#allocation4], 0
    %14 = vsyncpa [#allocation9], 0
    %15 = vsyncpa [#allocation12], 0
    // Predicated region
    $region2: #{tpu_custom_call.1} parent=1 // pred_check
      _
    $region3: #{tpu_custom_call.1} parent=1 // pred_check_branch
      %17 = sbr.rel (0) target = $region5
    $region4: #{tpu_custom_call.1} parent=1 // pred_region
      %s19 = ssub.s32 6528, 6528
      %20 = vsyncadd [#allocation3], %s19
      %s21 = sshll.u32 [#allocation2], 4
      %s22 = int_to_ptr.vmem [resolvable:$true] %s21
      %27 = dma.hbm_to_vmem [thread:$0]  %s0, 6528, %s22, [#allocation3], 128, 128, 8
    $region5: #{tpu_custom_call.1} parent=1 // pred_fallthru
      _
    // Predicated region
    $region6: #{tpu_custom_call.1} parent=1 // pred_check
      _
    $region7: #{tpu_custom_call.1} parent=1 // pred_check_branch
      %29 = sbr.rel (0) target = $region9
    $region8: #{tpu_custom_call.1} parent=1 // pred_region
      %s31 = ssub.s32 6528, 6528
      %32 = vsyncadd [#allocation6], %s31
      %s33 = sshll.u32 [#allocation5], 4
      %s34 = int_to_ptr.vmem [resolvable:$true] %s33
      %39 = dma.hbm_to_vmem [thread:$0]  %s1, 6528, %s34, [#allocation6], 128, 128, 8
    $region9: #{tpu_custom_call.1} parent=1 // pred_fallthru
      _
    // Predicated region
    $region10: #{tpu_custom_call.1} parent=1 // pred_check
      _
    $region11: #{tpu_custom_call.1} parent=1 // pred_check_branch
      %41 = sbr.rel (0) target = $region13
    $region12: #{tpu_custom_call.1} parent=1 // pred_region
      %42 = dma.done [#allocation3], 6528
    $region13: #{tpu_custom_call.1} parent=1 // pred_fallthru
      _
    // Predicated region
    $region14: #{tpu_custom_call.1} parent=1 // pred_check
      _
    $region15: #{tpu_custom_call.1} parent=1 // pred_check_branch
      %44 = sbr.rel (0) target = $region17
    $region16: #{tpu_custom_call.1} parent=1 // pred_region
      %45 = dma.done [#allocation6], 6528
    $region17: #{tpu_custom_call.1} parent=1 // pred_fallthru
      _
    %s46 = scalar_lea.vmem [#allocation2], 272
    %v47 = vld [vmem:[%s46] sm:$0xff]
    %v48 = vld [vmem:[%s46 + $0x8] sm:$0xff]
    %v49 = vld [vmem:[%s46 + $0x10] sm:$0xff]
    %v50 = vld [vmem:[%s46 + $0x18] sm:$0xff]
    %v51 = vld [vmem:[%s46 + $0x20] sm:$0xff]
    %v52 = vld [vmem:[%s46 + $0x28] sm:$0xff]
    %v53 = vld [vmem:[%s46 + $0x30] sm:$0xff]
    %v54 = vld [vmem:[%s46 + $0x38] sm:$0xff]
    %v55 = vld [vmem:[%s46 + $0x40] sm:$0xff]
    %v56 = vld [vmem:[%s46 + $0x48] sm:$0xff]
    %v57 = vld [vmem:[%s46 + $0x50] sm:$0xff]
    %v58 = vld [vmem:[%s46 + $0x58] sm:$0xff]
    %v59 = vld [vmem:[%s46 + $0x60] sm:$0xff]
    %v60 = vld [vmem:[%s46 + $0x68] sm:$0xff]
    %v61 = vld [vmem:[%s46 + $0x70] sm:$0xff]
    %v62 = vld [vmem:[%s46 + $0x78] sm:$0xff]
    %v63 = vld [vmem:[%s46 + $0x80] sm:$0xff]
    %v64 = vadd.f32 %v47, -5.0
    %v65 = vadd.f32 %v48, -5.0
    %v66 = vadd.f32 %v49, -5.0
    %v67 = vadd.f32 %v50, -5.0
    %v68 = vadd.f32 %v51, -5.0
    %v69 = vadd.f32 %v52, -5.0
    %v70 = vadd.f32 %v53, -5.0
    %v71 = vadd.f32 %v54, -5.0
    %v72 = vadd.f32 %v55, -5.0
    %v73 = vadd.f32 %v56, -5.0
    %v74 = vadd.f32 %v57, -5.0
    %v75 = vadd.f32 %v58, -5.0
    %v76 = vadd.f32 %v59, -5.0
    %v77 = vadd.f32 %v60, -5.0
    %v78 = vadd.f32 %v61, -5.0
    %v79 = vadd.f32 %v62, -5.0
    %v80 = vadd.f32 %v63, -5.0
    %v81 = vxor.u32 %v64, 2147483648
    %v82 = vxor.u32 %v65, 2147483648
    %v83 = vxor.u32 %v66, 2147483648
    %v84 = vxor.u32 %v67, 2147483648
    %v85 = vxor.u32 %v68, 2147483648
    %v86 = vxor.u32 %v69, 2147483648
    %v87 = vxor.u32 %v70, 2147483648
    %v88 = vxor.u32 %v71, 2147483648
    %v89 = vxor.u32 %v72, 2147483648
    %v90 = vxor.u32 %v73, 2147483648
    %v91 = vxor.u32 %v74, 2147483648
    %v92 = vxor.u32 %v75, 2147483648
    %v93 = vxor.u32 %v76, 2147483648
    %v94 = vxor.u32 %v77, 2147483648
    %v95 = vxor.u32 %v78, 2147483648
    %v96 = vxor.u32 %v79, 2147483648
    %v97 = vxor.u32 %v80, 2147483648
    %v98 = vmul.f32 %v81, 1.442695
    %v99 = vpow.pop %v98
    %v100 = vmul.f32 %v82, 1.442695
    %v101 = vpow.pop %v100
    %v102 = vmul.f32 %v83, 1.442695
    %v103 = vpow.pop %v102
    %v104 = vmul.f32 %v84, 1.442695
    %v105 = vpow.pop %v104
    %v106 = vmul.f32 %v85, 1.442695
    %v107 = vpow.pop %v106
    %v108 = vmul.f32 %v86, 1.442695
    %v109 = vpow.pop %v108
    %v110 = vmul.f32 %v87, 1.442695
    %v111 = vpow.pop %v110
    %v112 = vmul.f32 %v88, 1.442695
    %v113 = vpow.pop %v112
    %v114 = vmul.f32 %v89, 1.442695
    %v115 = vpow.pop %v114
    %v116 = vmul.f32 %v90, 1.442695
    %v117 = vpow.pop %v116
    %v118 = vmul.f32 %v91, 1.442695
    %v119 = vpow.pop %v118
    %v120 = vmul.f32 %v92, 1.442695
    %v121 = vpow.pop %v120
    %v122 = vmul.f32 %v93, 1.442695
    %v123 = vpow.pop %v122
    %v124 = vmul.f32 %v94, 1.442695
    %v125 = vpow.pop %v124
    %v126 = vmul.f32 %v95, 1.442695
    %v127 = vpow.pop %v126
    %v128 = vmul.f32 %v96, 1.442695
    %v129 = vpow.pop %v128
    %v130 = vmul.f32 %v97, 1.442695
    %v131 = vpow.pop %v130
    %v132 = vadd.f32 %v99, 1.0
    %v133 = vadd.f32 %v101, 1.0
    %v134 = vadd.f32 %v103, 1.0
    %v135 = vadd.f32 %v105, 1.0
    %v136 = vadd.f32 %v107, 1.0
    %v137 = vadd.f32 %v109, 1.0
    %v138 = vadd.f32 %v111, 1.0
    %v139 = vadd.f32 %v113, 1.0
    %v140 = vadd.f32 %v115, 1.0
    %v141 = vadd.f32 %v117, 1.0
    %v142 = vadd.f32 %v119, 1.0
    %v143 = vadd.f32 %v121, 1.0
    %v144 = vadd.f32 %v123, 1.0
    %v145 = vadd.f32 %v125, 1.0
    %v146 = vadd.f32 %v127, 1.0
    %v147 = vadd.f32 %v129, 1.0
    %v148 = vadd.f32 %v131, 1.0
    %v149 = vrcp.pop %v132
    %v150 = vmul.f32 1.0, %v149
    %v151 = vrcp.pop %v133
    %v152 = vmul.f32 1.0, %v151
    %v153 = vrcp.pop %v134
    %v154 = vmul.f32 1.0, %v153
    %v155 = vrcp.pop %v135
    %v156 = vmul.f32 1.0, %v155
    %v157 = vrcp.pop %v136
    %v158 = vmul.f32 1.0, %v157
    %v159 = vrcp.pop %v137
    %v160 = vmul.f32 1.0, %v159
    %v161 = vrcp.pop %v138
    %v162 = vmul.f32 1.0, %v161
    %v163 = vrcp.pop %v139
    %v164 = vmul.f32 1.0, %v163
    %v165 = vrcp.pop %v140
    %v166 = vmul.f32 1.0, %v165
    %v167 = vrcp.pop %v141
    %v168 = vmul.f32 1.0, %v167
    %v169 = vrcp.pop %v142
    %v170 = vmul.f32 1.0, %v169
    %v171 = vrcp.pop %v143
    %v172 = vmul.f32 1.0, %v171
    %v173 = vrcp.pop %v144
    %v174 = vmul.f32 1.0, %v173
    %v175 = vrcp.pop %v145
    %v176 = vmul.f32 1.0, %v175
    %v177 = vrcp.pop %v146
    %v178 = vmul.f32 1.0, %v177
    %v179 = vrcp.pop %v147
    %v180 = vmul.f32 1.0, %v179
    %v181 = vrcp.pop %v148
    %v182 = vmul.f32 1.0, %v181
    %v183 = vld [vmem:[#allocation2] sm:$0xff]
    %v184 = vld [vmem:[#allocation2 + $0x8] sm:$0xff]
    %v185 = vld [vmem:[#allocation2 + $0x10] sm:$0xff]
    %v186 = vld [vmem:[#allocation2 + $0x18] sm:$0xff]
    %v187 = vld [vmem:[#allocation2 + $0x20] sm:$0xff]
    %v188 = vld [vmem:[#allocation2 + $0x28] sm:$0xff]
    %v189 = vld [vmem:[#allocation2 + $0x30] sm:$0xff]
    %v190 = vld [vmem:[#allocation2 + $0x38] sm:$0xff]
    %v191 = vld [vmem:[#allocation2 + $0x40] sm:$0xff]
    %v192 = vld [vmem:[#allocation2 + $0x48] sm:$0xff]
    %v193 = vld [vmem:[#allocation2 + $0x50] sm:$0xff]
    %v194 = vld [vmem:[#allocation2 + $0x58] sm:$0xff]
    %v195 = vld [vmem:[#allocation2 + $0x60] sm:$0xff]
    %v196 = vld [vmem:[#allocation2 + $0x68] sm:$0xff]
    %v197 = vld [vmem:[#allocation2 + $0x70] sm:$0xff]
    %v198 = vld [vmem:[#allocation2 + $0x78] sm:$0xff]
    %v199 = vld [vmem:[#allocation2 + $0x80] sm:$0xff]
    %s200 = scalar_lea.vmem [#allocation2], 136
    %v201 = vld [vmem:[%s200] sm:$0xff]
    %v202 = vld [vmem:[%s200 + $0x8] sm:$0xff]
    %v203 = vld [vmem:[%s200 + $0x10] sm:$0xff]
    %v204 = vld [vmem:[%s200 + $0x18] sm:$0xff]
    %v205 = vld [vmem:[%s200 + $0x20] sm:$0xff]
    %v206 = vld [vmem:[%s200 + $0x28] sm:$0xff]
    %v207 = vld [vmem:[%s200 + $0x30] sm:$0xff]
    %v208 = vld [vmem:[%s200 + $0x38] sm:$0xff]
    %v209 = vld [vmem:[%s200 + $0x40] sm:$0xff]
    %v210 = vld [vmem:[%s200 + $0x48] sm:$0xff]
    %v211 = vld [vmem:[%s200 + $0x50] sm:$0xff]
    %v212 = vld [vmem:[%s200 + $0x58] sm:$0xff]
    %v213 = vld [vmem:[%s200 + $0x60] sm:$0xff]
    %v214 = vld [vmem:[%s200 + $0x68] sm:$0xff]
    %v215 = vld [vmem:[%s200 + $0x70] sm:$0xff]
    %v216 = vld [vmem:[%s200 + $0x78] sm:$0xff]
    %v217 = vld [vmem:[%s200 + $0x80] sm:$0xff]
    %v218 = vmul.f32 %v150, %v201
    %v219 = vmul.f32 %v152, %v202
    %v220 = vmul.f32 %v154, %v203
    %v221 = vmul.f32 %v156, %v204
    %v222 = vmul.f32 %v158, %v205
    %v223 = vmul.f32 %v160, %v206
    %v224 = vmul.f32 %v162, %v207
    %v225 = vmul.f32 %v164, %v208
    %v226 = vmul.f32 %v166, %v209
    %v227 = vmul.f32 %v168, %v210
    %v228 = vmul.f32 %v170, %v211
    %v229 = vmul.f32 %v172, %v212
    %v230 = vmul.f32 %v174, %v213
    %v231 = vmul.f32 %v176, %v214
    %v232 = vmul.f32 %v178, %v215
    %v233 = vmul.f32 %v180, %v216
    %v234 = vmul.f32 %v182, %v217
    %v235 = vadd.f32 %v183, %v218
    %v236 = vadd.f32 %v184, %v219
    %v237 = vadd.f32 %v185, %v220
    %v238 = vadd.f32 %v186, %v221
    %v239 = vadd.f32 %v187, %v222
    %v240 = vadd.f32 %v188, %v223
    %v241 = vadd.f32 %v189, %v224
    %v242 = vadd.f32 %v190, %v225
    %v243 = vadd.f32 %v191, %v226
    %v244 = vadd.f32 %v192, %v227
    %v245 = vadd.f32 %v193, %v228
    %v246 = vadd.f32 %v194, %v229
    %v247 = vadd.f32 %v195, %v230
    %v248 = vadd.f32 %v196, %v231
    %v249 = vadd.f32 %v197, %v232
    %v250 = vadd.f32 %v198, %v233
    %v251 = vadd.f32 %v199, %v234
    %v252 = vpack.c.bf16 %v236, %v235
    %v253 = vpack.c.bf16 %v238, %v237
    %v254 = vpack.c.bf16 %v240, %v239
    %v255 = vpack.c.bf16 %v242, %v241
    %v256 = vpack.c.bf16 %v244, %v243
    %v257 = vpack.c.bf16 %v246, %v245
    %v258 = vpack.c.bf16 %v248, %v247
    %v259 = vpack.c.bf16 %v250, %v249
    %v268 = vunpack.c.l.b16 %v252
    %v269 = vunpack.c.h.b16 %v252
    %v270 = vunpack.c.l.b16 %v253
    %v271 = vunpack.c.h.b16 %v253
    %v272 = vunpack.c.l.b16 %v254
    %v273 = vunpack.c.h.b16 %v254
    %v274 = vunpack.c.l.b16 %v255
    %v275 = vunpack.c.h.b16 %v255
    %v276 = vunpack.c.l.b16 %v256
    %v277 = vunpack.c.h.b16 %v256
    %v278 = vunpack.c.l.b16 %v257
    %v279 = vunpack.c.h.b16 %v257
    %v280 = vunpack.c.l.b16 %v258
    %v281 = vunpack.c.h.b16 %v258
    %v282 = vunpack.c.l.b16 %v259
    %v283 = vunpack.c.h.b16 %v259
    %v284 = vpack.c.b16 %v268, %v268
    %v285 = vpack.c.b16 %v269, %v269
    %v286 = vpack.c.b16 %v270, %v270
    %v287 = vpack.c.b16 %v271, %v271
    %v288 = vpack.c.b16 %v272, %v272
    %v289 = vpack.c.b16 %v273, %v273
    %v290 = vpack.c.b16 %v274, %v274
    %v291 = vpack.c.b16 %v275, %v275
    %v292 = vpack.c.b16 %v276, %v276
    %v293 = vpack.c.b16 %v277, %v277
    %v294 = vpack.c.b16 %v278, %v278
    %v295 = vpack.c.b16 %v279, %v279
    %v296 = vpack.c.b16 %v280, %v280
    %v297 = vpack.c.b16 %v281, %v281
    %v298 = vpack.c.b16 %v282, %v282
    %v299 = vpack.c.b16 %v283, %v283
    %316 = vst [vmem:[#allocation7] sm:$0xf] %v284
    %317 = vst [vmem:[#allocation7 + $0x4] sm:$0xf] %v285
    %318 = vst [vmem:[#allocation7 + $0x8] sm:$0xf] %v286
    %319 = vst [vmem:[#allocation7 + $0xc] sm:$0xf] %v287
    %320 = vst [vmem:[#allocation7 + $0x10] sm:$0xf] %v288
    %321 = vst [vmem:[#allocation7 + $0x14] sm:$0xf] %v289
    %322 = vst [vmem:[#allocation7 + $0x18] sm:$0xf] %v290
    %323 = vst [vmem:[#allocation7 + $0x1c] sm:$0xf] %v291
    %324 = vst [vmem:[#allocation7 + $0x20] sm:$0xf] %v292
    %325 = vst [vmem:[#allocation7 + $0x24] sm:$0xf] %v293
    %326 = vst [vmem:[#allocation7 + $0x28] sm:$0xf] %v294
    %327 = vst [vmem:[#allocation7 + $0x2c] sm:$0xf] %v295
    %328 = vst [vmem:[#allocation7 + $0x30] sm:$0xf] %v296
    %329 = vst [vmem:[#allocation7 + $0x34] sm:$0xf] %v297
    %330 = vst [vmem:[#allocation7 + $0x38] sm:$0xf] %v298
    %331 = vst [vmem:[#allocation7 + $0x3c] sm:$0xf] %v299
    %332 = vst [vmem:[#allocation8] sm:$0x1] %v251
    %s333 = scalar_lea.vmem [#allocation5], 272
    %v334 = vld [vmem:[%s333] sm:$0xff]
    %v335 = vld [vmem:[%s333 + $0x8] sm:$0xff]
    %v336 = vld [vmem:[%s333 + $0x10] sm:$0xff]
    %v337 = vld [vmem:[%s333 + $0x18] sm:$0xff]
    %v338 = vld [vmem:[%s333 + $0x20] sm:$0xff]
    %v339 = vld [vmem:[%s333 + $0x28] sm:$0xff]
    %v340 = vld [vmem:[%s333 + $0x30] sm:$0xff]
    %v341 = vld [vmem:[%s333 + $0x38] sm:$0xff]
    %v342 = vld [vmem:[%s333 + $0x40] sm:$0xff]
    %v343 = vld [vmem:[%s333 + $0x48] sm:$0xff]
    %v344 = vld [vmem:[%s333 + $0x50] sm:$0xff]
    %v345 = vld [vmem:[%s333 + $0x58] sm:$0xff]
    %v346 = vld [vmem:[%s333 + $0x60] sm:$0xff]
    %v347 = vld [vmem:[%s333 + $0x68] sm:$0xff]
    %v348 = vld [vmem:[%s333 + $0x70] sm:$0xff]
    %v349 = vld [vmem:[%s333 + $0x78] sm:$0xff]
    %v350 = vld [vmem:[%s333 + $0x80] sm:$0xff]
    %v351 = vadd.f32 %v334, -5.0
    %v352 = vadd.f32 %v335, -5.0
    %v353 = vadd.f32 %v336, -5.0
    %v354 = vadd.f32 %v337, -5.0
    %v355 = vadd.f32 %v338, -5.0
    %v356 = vadd.f32 %v339, -5.0
    %v357 = vadd.f32 %v340, -5.0
    %v358 = vadd.f32 %v341, -5.0
    %v359 = vadd.f32 %v342, -5.0
    %v360 = vadd.f32 %v343, -5.0
    %v361 = vadd.f32 %v344, -5.0
    %v362 = vadd.f32 %v345, -5.0
    %v363 = vadd.f32 %v346, -5.0
    %v364 = vadd.f32 %v347, -5.0
    %v365 = vadd.f32 %v348, -5.0
    %v366 = vadd.f32 %v349, -5.0
    %v367 = vadd.f32 %v350, -5.0
    %v368 = vxor.u32 %v351, 2147483648
    %v369 = vxor.u32 %v352, 2147483648
    %v370 = vxor.u32 %v353, 2147483648
    %v371 = vxor.u32 %v354, 2147483648
    %v372 = vxor.u32 %v355, 2147483648
    %v373 = vxor.u32 %v356, 2147483648
    %v374 = vxor.u32 %v357, 2147483648
    %v375 = vxor.u32 %v358, 2147483648
    %v376 = vxor.u32 %v359, 2147483648
    %v377 = vxor.u32 %v360, 2147483648
    %v378 = vxor.u32 %v361, 2147483648
    %v379 = vxor.u32 %v362, 2147483648
    %v380 = vxor.u32 %v363, 2147483648
    %v381 = vxor.u32 %v364, 2147483648
    %v382 = vxor.u32 %v365, 2147483648
    %v383 = vxor.u32 %v366, 2147483648
    %v384 = vxor.u32 %v367, 2147483648
    %v385 = vmul.f32 %v368, 1.442695
    %v386 = vpow.pop %v385
    %v387 = vmul.f32 %v369, 1.442695
    %v388 = vpow.pop %v387
    %v389 = vmul.f32 %v370, 1.442695
    %v390 = vpow.pop %v389
    %v391 = vmul.f32 %v371, 1.442695
    %v392 = vpow.pop %v391
    %v393 = vmul.f32 %v372, 1.442695
    %v394 = vpow.pop %v393
    %v395 = vmul.f32 %v373, 1.442695
    %v396 = vpow.pop %v395
    %v397 = vmul.f32 %v374, 1.442695
    %v398 = vpow.pop %v397
    %v399 = vmul.f32 %v375, 1.442695
    %v400 = vpow.pop %v399
    %v401 = vmul.f32 %v376, 1.442695
    %v402 = vpow.pop %v401
    %v403 = vmul.f32 %v377, 1.442695
    %v404 = vpow.pop %v403
    %v405 = vmul.f32 %v378, 1.442695
    %v406 = vpow.pop %v405
    %v407 = vmul.f32 %v379, 1.442695
    %v408 = vpow.pop %v407
    %v409 = vmul.f32 %v380, 1.442695
    %v410 = vpow.pop %v409
    %v411 = vmul.f32 %v381, 1.442695
    %v412 = vpow.pop %v411
    %v413 = vmul.f32 %v382, 1.442695
    %v414 = vpow.pop %v413
    %v415 = vmul.f32 %v383, 1.442695
    %v416 = vpow.pop %v415
    %v417 = vmul.f32 %v384, 1.442695
    %v418 = vpow.pop %v417
    %v419 = vadd.f32 %v386, 1.0
    %v420 = vadd.f32 %v388, 1.0
    %v421 = vadd.f32 %v390, 1.0
    %v422 = vadd.f32 %v392, 1.0
    %v423 = vadd.f32 %v394, 1.0
    %v424 = vadd.f32 %v396, 1.0
    %v425 = vadd.f32 %v398, 1.0
    %v426 = vadd.f32 %v400, 1.0
    %v427 = vadd.f32 %v402, 1.0
    %v428 = vadd.f32 %v404, 1.0
    %v429 = vadd.f32 %v406, 1.0
    %v430 = vadd.f32 %v408, 1.0
    %v431 = vadd.f32 %v410, 1.0
    %v432 = vadd.f32 %v412, 1.0
    %v433 = vadd.f32 %v414, 1.0
    %v434 = vadd.f32 %v416, 1.0
    %v435 = vadd.f32 %v418, 1.0
    %v436 = vrcp.pop %v419
    %v437 = vmul.f32 1.0, %v436
    %v438 = vrcp.pop %v420
    %v439 = vmul.f32 1.0, %v438
    %v440 = vrcp.pop %v421
    %v441 = vmul.f32 1.0, %v440
    %v442 = vrcp.pop %v422
    %v443 = vmul.f32 1.0, %v442
    %v444 = vrcp.pop %v423
    %v445 = vmul.f32 1.0, %v444
    %v446 = vrcp.pop %v424
    %v447 = vmul.f32 1.0, %v446
    %v448 = vrcp.pop %v425
    %v449 = vmul.f32 1.0, %v448
    %v450 = vrcp.pop %v426
    %v451 = vmul.f32 1.0, %v450
    %v452 = vrcp.pop %v427
    %v453 = vmul.f32 1.0, %v452
    %v454 = vrcp.pop %v428
    %v455 = vmul.f32 1.0, %v454
    %v456 = vrcp.pop %v429
    %v457 = vmul.f32 1.0, %v456
    %v458 = vrcp.pop %v430
    %v459 = vmul.f32 1.0, %v458
    %v460 = vrcp.pop %v431
    %v461 = vmul.f32 1.0, %v460
    %v462 = vrcp.pop %v432
    %v463 = vmul.f32 1.0, %v462
    %v464 = vrcp.pop %v433
    %v465 = vmul.f32 1.0, %v464
    %v466 = vrcp.pop %v434
    %v467 = vmul.f32 1.0, %v466
    %v468 = vrcp.pop %v435
    %v469 = vmul.f32 1.0, %v468
    %v470 = vld [vmem:[#allocation5] sm:$0xff]
    %v471 = vld [vmem:[#allocation5 + $0x8] sm:$0xff]
    %v472 = vld [vmem:[#allocation5 + $0x10] sm:$0xff]
    %v473 = vld [vmem:[#allocation5 + $0x18] sm:$0xff]
    %v474 = vld [vmem:[#allocation5 + $0x20] sm:$0xff]
    %v475 = vld [vmem:[#allocation5 + $0x28] sm:$0xff]
    %v476 = vld [vmem:[#allocation5 + $0x30] sm:$0xff]
    %v477 = vld [vmem:[#allocation5 + $0x38] sm:$0xff]
    %v478 = vld [vmem:[#allocation5 + $0x40] sm:$0xff]
    %v479 = vld [vmem:[#allocation5 + $0x48] sm:$0xff]
    %v480 = vld [vmem:[#allocation5 + $0x50] sm:$0xff]
    %v481 = vld [vmem:[#allocation5 + $0x58] sm:$0xff]
    %v482 = vld [vmem:[#allocation5 + $0x60] sm:$0xff]
    %v483 = vld [vmem:[#allocation5 + $0x68] sm:$0xff]
    %v484 = vld [vmem:[#allocation5 + $0x70] sm:$0xff]
    %v485 = vld [vmem:[#allocation5 + $0x78] sm:$0xff]
    %v486 = vld [vmem:[#allocation5 + $0x80] sm:$0xff]
    %s487 = scalar_lea.vmem [#allocation5], 136
    %v488 = vld [vmem:[%s487] sm:$0xff]
    %v489 = vld [vmem:[%s487 + $0x8] sm:$0xff]
    %v490 = vld [vmem:[%s487 + $0x10] sm:$0xff]
    %v491 = vld [vmem:[%s487 + $0x18] sm:$0xff]
    %v492 = vld [vmem:[%s487 + $0x20] sm:$0xff]
    %v493 = vld [vmem:[%s487 + $0x28] sm:$0xff]
    %v494 = vld [vmem:[%s487 + $0x30] sm:$0xff]
    %v495 = vld [vmem:[%s487 + $0x38] sm:$0xff]
    %v496 = vld [vmem:[%s487 + $0x40] sm:$0xff]
    %v497 = vld [vmem:[%s487 + $0x48] sm:$0xff]
    %v498 = vld [vmem:[%s487 + $0x50] sm:$0xff]
    %v499 = vld [vmem:[%s487 + $0x58] sm:$0xff]
    %v500 = vld [vmem:[%s487 + $0x60] sm:$0xff]
    %v501 = vld [vmem:[%s487 + $0x68] sm:$0xff]
    %v502 = vld [vmem:[%s487 + $0x70] sm:$0xff]
    %v503 = vld [vmem:[%s487 + $0x78] sm:$0xff]
    %v504 = vld [vmem:[%s487 + $0x80] sm:$0xff]
    %v505 = vmul.f32 %v437, %v488
    %v506 = vmul.f32 %v439, %v489
    %v507 = vmul.f32 %v441, %v490
    %v508 = vmul.f32 %v443, %v491
    %v509 = vmul.f32 %v445, %v492
    %v510 = vmul.f32 %v447, %v493
    %v511 = vmul.f32 %v449, %v494
    %v512 = vmul.f32 %v451, %v495
    %v513 = vmul.f32 %v453, %v496
    %v514 = vmul.f32 %v455, %v497
    %v515 = vmul.f32 %v457, %v498
    %v516 = vmul.f32 %v459, %v499
    %v517 = vmul.f32 %v461, %v500
    %v518 = vmul.f32 %v463, %v501
    %v519 = vmul.f32 %v465, %v502
    %v520 = vmul.f32 %v467, %v503
    %v521 = vmul.f32 %v469, %v504
    %v522 = vadd.f32 %v470, %v505
    %v523 = vadd.f32 %v471, %v506
    %v524 = vadd.f32 %v472, %v507
    %v525 = vadd.f32 %v473, %v508
    %v526 = vadd.f32 %v474, %v509
    %v527 = vadd.f32 %v475, %v510
    %v528 = vadd.f32 %v476, %v511
    %v529 = vadd.f32 %v477, %v512
    %v530 = vadd.f32 %v478, %v513
    %v531 = vadd.f32 %v479, %v514
    %v532 = vadd.f32 %v480, %v515
    %v533 = vadd.f32 %v481, %v516
    %v534 = vadd.f32 %v482, %v517
    %v535 = vadd.f32 %v483, %v518
    %v536 = vadd.f32 %v484, %v519
    %v537 = vadd.f32 %v485, %v520
    %v538 = vadd.f32 %v486, %v521
    %v539 = vpack.c.bf16 %v523, %v522
    %v540 = vpack.c.bf16 %v525, %v524
    %v541 = vpack.c.bf16 %v527, %v526
    %v542 = vpack.c.bf16 %v529, %v528
    %v543 = vpack.c.bf16 %v531, %v530
    %v544 = vpack.c.bf16 %v533, %v532
    %v545 = vpack.c.bf16 %v535, %v534
    %v546 = vpack.c.bf16 %v537, %v536
    %v555 = vunpack.c.l.b16 %v539
    %v556 = vunpack.c.h.b16 %v539
    %v557 = vunpack.c.l.b16 %v540
    %v558 = vunpack.c.h.b16 %v540
    %v559 = vunpack.c.l.b16 %v541
    %v560 = vunpack.c.h.b16 %v541
    %v561 = vunpack.c.l.b16 %v542
    %v562 = vunpack.c.h.b16 %v542
    %v563 = vunpack.c.l.b16 %v543
    %v564 = vunpack.c.h.b16 %v543
    %v565 = vunpack.c.l.b16 %v544
    %v566 = vunpack.c.h.b16 %v544
    %v567 = vunpack.c.l.b16 %v545
    %v568 = vunpack.c.h.b16 %v545
    %v569 = vunpack.c.l.b16 %v546
    %v570 = vunpack.c.h.b16 %v546
    %v571 = vpack.c.b16 %v555, %v555
    %v572 = vpack.c.b16 %v556, %v556
    %v573 = vpack.c.b16 %v557, %v557
    %v574 = vpack.c.b16 %v558, %v558
    %v575 = vpack.c.b16 %v559, %v559
    %v576 = vpack.c.b16 %v560, %v560
    %v577 = vpack.c.b16 %v561, %v561
    %v578 = vpack.c.b16 %v562, %v562
    %v579 = vpack.c.b16 %v563, %v563
    %v580 = vpack.c.b16 %v564, %v564
    %v581 = vpack.c.b16 %v565, %v565
    %v582 = vpack.c.b16 %v566, %v566
    %v583 = vpack.c.b16 %v567, %v567
    %v584 = vpack.c.b16 %v568, %v568
    %v585 = vpack.c.b16 %v569, %v569
    %v586 = vpack.c.b16 %v570, %v570
    %603 = vst [vmem:[#allocation10] sm:$0xf] %v571
    %604 = vst [vmem:[#allocation10 + $0x4] sm:$0xf] %v572
    %605 = vst [vmem:[#allocation10 + $0x8] sm:$0xf] %v573
    %606 = vst [vmem:[#allocation10 + $0xc] sm:$0xf] %v574
    %607 = vst [vmem:[#allocation10 + $0x10] sm:$0xf] %v575
    %608 = vst [vmem:[#allocation10 + $0x14] sm:$0xf] %v576
    %609 = vst [vmem:[#allocation10 + $0x18] sm:$0xf] %v577
    %610 = vst [vmem:[#allocation10 + $0x1c] sm:$0xf] %v578
    %611 = vst [vmem:[#allocation10 + $0x20] sm:$0xf] %v579
    %612 = vst [vmem:[#allocation10 + $0x24] sm:$0xf] %v580
    %613 = vst [vmem:[#allocation10 + $0x28] sm:$0xf] %v581
    %614 = vst [vmem:[#allocation10 + $0x2c] sm:$0xf] %v582
    %615 = vst [vmem:[#allocation10 + $0x30] sm:$0xf] %v583
    %616 = vst [vmem:[#allocation10 + $0x34] sm:$0xf] %v584
    %617 = vst [vmem:[#allocation10 + $0x38] sm:$0xf] %v585
    %618 = vst [vmem:[#allocation10 + $0x3c] sm:$0xf] %v586
    %619 = vst [vmem:[#allocation11] sm:$0x1] %v538
    // Predicated region
    $region18: #{tpu_custom_call.1} parent=1 // pred_check
      _
    $region19: #{tpu_custom_call.1} parent=1 // pred_check_branch
      %621 = sbr.rel (0) target = $region21
    $region20: #{tpu_custom_call.1} parent=1 // pred_region
      %s623 = ssub.s32 1024, 1024
      %624 = vsyncadd [#allocation4], %s623
      %s625 = sshll.u32 [#allocation7], 4
      %s626 = int_to_ptr.vmem [resolvable:$true] %s625
      %631 = dma.vmem_to_hbm [thread:$0]  %s626, 1024, %s2, [#allocation4], 64, 64, 4
    $region21: #{tpu_custom_call.1} parent=1 // pred_fallthru
      _
    // Predicated region
    $region22: #{tpu_custom_call.1} parent=1 // pred_check
      _
    $region23: #{tpu_custom_call.1} parent=1 // pred_check_branch
      %633 = sbr.rel (0) target = $region25
    $region24: #{tpu_custom_call.1} parent=1 // pred_region
      %s635 = ssub.s32 16, 16
      %636 = vsyncadd [#allocation9], %s635
      %s638 = sshll.u32 [#allocation8], 4
      %s639 = int_to_ptr.vmem [resolvable:$true] %s638
      %641 = dma.vmem_to_hbm [thread:$0]  %s639, 16, %s3, [#allocation9]
    $region25: #{tpu_custom_call.1} parent=1 // pred_fallthru
      _
    // Predicated region
    $region26: #{tpu_custom_call.1} parent=1 // pred_check
      _
    $region27: #{tpu_custom_call.1} parent=1 // pred_check_branch
      %643 = sbr.rel (0) target = $region29
    $region28: #{tpu_custom_call.1} parent=1 // pred_region
      %s645 = ssub.s32 1024, 1024
      %646 = vsyncadd [#allocation9], %s645
      %s647 = sshll.u32 [#allocation10], 4
      %s648 = int_to_ptr.vmem [resolvable:$true] %s647
      %653 = dma.vmem_to_hbm [thread:$0]  %s648, 1024, %s4, [#allocation9], 64, 64, 4
    $region29: #{tpu_custom_call.1} parent=1 // pred_fallthru
      _
    // Predicated region
    $region30: #{tpu_custom_call.1} parent=1 // pred_check
      _
    $region31: #{tpu_custom_call.1} parent=1 // pred_check_branch
      %655 = sbr.rel (0) target = $region33
    $region32: #{tpu_custom_call.1} parent=1 // pred_region
      %s657 = ssub.s32 16, 16
      %658 = vsyncadd [#allocation12], %s657
      %s660 = sshll.u32 [#allocation11], 4
      %s661 = int_to_ptr.vmem [resolvable:$true] %s660
      %663 = dma.vmem_to_hbm [thread:$0]  %s661, 16, %s5, [#allocation12]
    $region33: #{tpu_custom_call.1} parent=1 // pred_fallthru
      _
    // Predicated region
    $region34: #{tpu_custom_call.1} parent=1 // pred_check
      _
    $region35: #{tpu_custom_call.1} parent=1 // pred_check_branch
      %665 = sbr.rel (0) target = $region37
    $region36: #{tpu_custom_call.1} parent=1 // pred_region
      %666 = dma.done [#allocation4], 1024
    $region37: #{tpu_custom_call.1} parent=1 // pred_fallthru
      _
    // Predicated region
    $region38: #{tpu_custom_call.1} parent=1 // pred_check
      _
    $region39: #{tpu_custom_call.1} parent=1 // pred_check_branch
      %668 = sbr.rel (0) target = $region41
    $region40: #{tpu_custom_call.1} parent=1 // pred_region
      %669 = dma.done [#allocation9], 16
    $region41: #{tpu_custom_call.1} parent=1 // pred_fallthru
      _
    // Predicated region
    $region42: #{tpu_custom_call.1} parent=1 // pred_check
      _
    $region43: #{tpu_custom_call.1} parent=1 // pred_check_branch
      %671 = sbr.rel (0) target = $region45
    $region44: #{tpu_custom_call.1} parent=1 // pred_region
      %672 = dma.done [#allocation9], 1024
    $region45: #{tpu_custom_call.1} parent=1 // pred_fallthru
      _
    // Predicated region
    $region46: #{tpu_custom_call.1} parent=1 // pred_check
      _
    $region47: #{tpu_custom_call.1} parent=1 // pred_check_branch
      %674 = sbr.rel (0) target = $region49
    $region48: #{tpu_custom_call.1} parent=1 // pred_region
      %675 = dma.done [#allocation12], 16
    $region49: #{tpu_custom_call.1} parent=1 // pred_fallthru
      _
    %676 = vsyncpa [#allocation3], 1
    %677 = vsyncpa [#allocation6], 1
    %678 = vsyncpa [#allocation4], 1
    %679 = vsyncpa [#allocation9], 1
    %680 = vsyncpa [#allocation12], 1

</llo_original>
